<compile_context>
chip_gen: v6e
topology: v6e:2x2x1
jax: 0.10.0
libtpu: 0.0.40
codegen_flags: <defaults>
</compile_context>

<pallas_src>
from functools import partial

import jax
import jax.numpy as jnp
from jax.experimental import pallas as pl
from jax.experimental.pallas import tpu as pltpu


def _round_up(n, m):
    return ((n + m - 1) // m) * m


def slp_kernel(xt_ref, w1t_ref, b1c_ref, w2t_ref, b2c_ref, ot_ref):
    # hidden^T = relu(W1^T @ x^T + b1)      shape (H_pad, TB), f32 MXU accumulation
    h = jnp.dot(w1t_ref[...], xt_ref[...], preferred_element_type=jnp.float32)
    h = jnp.maximum(h + b1c_ref[...], 0.0)              # bias + ReLU on the VPU
    # y^T = W2^T @ hidden^T + b2            shape (D_OUT_pad, TB)
    y = jnp.dot(w2t_ref[...], h, preferred_element_type=jnp.float32)
    ot_ref[...] = (y + b2c_ref[...]).astype(ot_ref.dtype)


@partial(jax.jit, static_argnames=("block_b",))
def slp_forward(x, w1, b1, w2, b2, *, block_b=2048):
    """Forward pass: relu(x @ w1 + b1) @ w2 + b2.

    x : (B, D_IN) f32;  w1: (D_IN, H);  b1: (H,);  w2: (H, D_OUT);  b2: (D_OUT,)
    returns (B, D_OUT) f32.
    """
    B, d_in = x.shape
    h_dim = w1.shape[1]
    d_out = w2.shape[1]

    # Batch tile: multiple of 128 lanes; pad B up to a whole number of tiles.
    tb = max(128, _round_up(min(block_b, B), 128))
    bp = _round_up(B, tb)
    grid = (bp // tb,)

    # Pad feature dims to sublane multiples (zero rows/cols -> exact math).
    d_in_p = _round_up(d_in, 8)
    h_pad = _round_up(h_dim, 8)
    d_out_p = _round_up(d_out, 8)

    f32 = jnp.float32

    # Layout plumbing done in the wrapper (feature-major, zero-padded).
    xt = jnp.zeros((d_in_p, bp), f32).at[:d_in, :B].set(x.T.astype(f32))
    w1t = jnp.zeros((h_pad, d_in_p), f32).at[:h_dim, :d_in].set(w1.T.astype(f32))
    b1c = jnp.zeros((h_pad, 1), f32).at[:h_dim, 0].set(b1.astype(f32))
    w2t = jnp.zeros((d_out_p, h_pad), f32).at[:d_out, :h_dim].set(w2.T.astype(f32))
    b2c = jnp.zeros((d_out_p, 1), f32).at[:d_out, 0].set(b2.astype(f32))

    flops = 2 * bp * (d_in_p * h_pad + h_pad * d_out_p)
    bytes_accessed = (bp * d_in_p * 4                    # x^T streamed in
                      + bp * d_out_p * 4                 # y^T streamed out
                      + (h_pad * d_in_p + d_out_p * h_pad
                         + h_pad + d_out_p) * 4)         # resident weights/biases

    yt = pl.pallas_call(
        slp_kernel,
        out_shape=jax.ShapeDtypeStruct((d_out_p, bp), f32),
        grid=grid,
        in_specs=[
            pl.BlockSpec((d_in_p, tb), lambda i: (0, i)),     # x^T: one tile / step
            pl.BlockSpec((h_pad, d_in_p), lambda i: (0, 0)),  # W1^T: resident
            pl.BlockSpec((h_pad, 1), lambda i: (0, 0)),       # b1:   resident
            pl.BlockSpec((d_out_p, h_pad), lambda i: (0, 0)), # W2^T: resident
            pl.BlockSpec((d_out_p, 1), lambda i: (0, 0)),     # b2:   resident
        ],
        out_specs=pl.BlockSpec((d_out_p, tb), lambda i: (0, i)),
        compiler_params=pltpu.CompilerParams(
            dimension_semantics=("parallel",),                # v7x: 2 TCs share grid
            vmem_limit_bytes=32 * 1024 * 1024,                # safe on v5e/v6e/v7x
        ),
        cost_estimate=pl.CostEstimate(
            flops=flops, transcendentals=0, bytes_accessed=bytes_accessed),
    )(xt, w1t, b1c, w2t, b2c)

    return yt[:d_out, :B].T


def slp_reference(x, w1, b1, w2, b2):
    """Plain-JAX f32 reference."""
    h = jnp.maximum(jnp.dot(x, w1, preferred_element_type=jnp.float32) + b1, 0.0)
    return jnp.dot(h, w2, preferred_element_type=jnp.float32) + b2


def init_slp_params(key, d_in, d_hidden, d_out):
    """Deterministic init mirroring torch.nn.Linear (U[-1/sqrt(fan_in), +1/sqrt(fan_in)])."""
    k1, k2, k3, k4 = jax.random.split(key, 4)
    lim1 = 1.0 / jnp.sqrt(jnp.float32(d_in))
    lim2 = 1.0 / jnp.sqrt(jnp.float32(d_hidden))
    w1 = jax.random.uniform(k1, (d_in, d_hidden), jnp.float32, -lim1, lim1)
    b1 = jax.random.uniform(k2, (d_hidden,), jnp.float32, -lim1, lim1)
    w2 = jax.random.uniform(k3, (d_hidden, d_out), jnp.float32, -lim2, lim2)
    b2 = jax.random.uniform(k4, (d_out,), jnp.float32, -lim2, lim2)
    return w1, b1, w2, b2


if __name__ == "__main__":
    # Module config: SLP(input_shape=(8,), output_shape=4) -> hidden = 40
    D_IN, D_HIDDEN, D_OUT = 8, 40, 4
    BATCH = 2

    key = jax.random.PRNGKey(0)
    kx, kp = jax.random.split(key)

    # torch forward does torch.from_numpy(x).float(); here x is float32 already.
    x = jax.random.normal(kx, (BATCH, D_IN), dtype=jnp.float32)
    w1, b1, w2, b2 = init_slp_params(kp, D_IN, D_HIDDEN, D_OUT)

    out = jax.block_until_ready(slp_forward(x, w1, b1, w2, b2))
    ref = slp_reference(x, w1, b1, w2, b2)
    assert out.shape == (BATCH, D_OUT)
    assert jnp.allclose(out, ref, atol=1e-4, rtol=1e-4)

    # Exercise the multi-tile (grid > 1) path with a ragged batch size.
    x2 = jax.random.normal(kx, (300, D_IN), dtype=jnp.float32)
    out2 = jax.block_until_ready(slp_forward(x2, w1, b1, w2, b2, block_b=128))
    ref2 = slp_reference(x2, w1, b1, w2, b2)
    assert out2.shape == (300, D_OUT)
    assert jnp.allclose(out2, ref2, atol=1e-4, rtol=1e-4)

    print("KERNEL_OK")
</pallas_src>

<mosaic_0001>
module attributes {stable_mosaic.version = 11 : i64} {
  func.func @slp_kernel(%arg0: i32, %arg1: memref<8x128xf32, #tpu.memory_space<vmem>>, %arg2: memref<40x8xf32, #tpu.memory_space<vmem>>, %arg3: memref<40x1xf32, #tpu.memory_space<vmem>>, %arg4: memref<8x40xf32, #tpu.memory_space<vmem>>, %arg5: memref<8x1xf32, #tpu.memory_space<vmem>>, %arg6: memref<8x128xf32, #tpu.memory_space<vmem>>) attributes {dimension_semantics = [#tpu.dimension_semantics<parallel>], iteration_bounds = array<i64: 1>, scalar_prefetch = 0 : i64, scratch_operands = 0 : i64, tpu.core_type = #tpu.core_type<tc>, window_params = [{transform_indices = @transform_0, window_bounds = array<i64: 8, 128>}, {pipeline_mode = #tpu.pipeline_mode<synchronous>, transform_indices = @transform_1, window_bounds = array<i64: 40, 8>}, {pipeline_mode = #tpu.pipeline_mode<synchronous>, transform_indices = @transform_2, window_bounds = array<i64: 40, 1>}, {pipeline_mode = #tpu.pipeline_mode<synchronous>, transform_indices = @transform_3, window_bounds = array<i64: 8, 40>}, {pipeline_mode = #tpu.pipeline_mode<synchronous>, transform_indices = @transform_4, window_bounds = array<i64: 8, 1>}, {transform_indices = @transform_5, window_bounds = array<i64: 8, 128>}]} {
    %c0 = arith.constant 0 : index
    %c0_0 = arith.constant 0 : index
    %0 = vector.load %arg2[%c0, %c0_0] : memref<40x8xf32, #tpu.memory_space<vmem>>, vector<40x8xf32>
    %c0_1 = arith.constant 0 : index
    %c0_2 = arith.constant 0 : index
    %1 = vector.load %arg1[%c0_1, %c0_2] : memref<8x128xf32, #tpu.memory_space<vmem>>, vector<8x128xf32>
    %cst = arith.constant dense<0.000000e+00> : vector<40x128xf32>
    %2 = tpu.matmul %0, %1, %cst {dimension_numbers = #tpu.dot_dimension_numbers<[1], [0], [0], [1], [0, 0, 1, 1], [], []>} : vector<40x8xf32>, vector<8x128xf32>, vector<40x128xf32> -> vector<40x128xf32>
    %c0_3 = arith.constant 0 : index
    %c0_4 = arith.constant 0 : index
    %3 = vector.load %arg3[%c0_3, %c0_4] : memref<40x1xf32, #tpu.memory_space<vmem>>, vector<40x1xf32>
    %4 = vector.broadcast %3 : vector<40x1xf32> to vector<40x128xf32>
    %5 = arith.addf %2, %4 : vector<40x128xf32>
    %cst_5 = arith.constant 0.000000e+00 : f32
    %6 = vector.broadcast %cst_5 : f32 to vector<40x128xf32>
    %7 = arith.maximumf %5, %6 : vector<40x128xf32>
    %c0_6 = arith.constant 0 : index
    %c0_7 = arith.constant 0 : index
    %8 = vector.load %arg4[%c0_6, %c0_7] : memref<8x40xf32, #tpu.memory_space<vmem>>, vector<8x40xf32>
    %cst_8 = arith.constant dense<0.000000e+00> : vector<8x128xf32>
    %9 = tpu.matmul %8, %7, %cst_8 {dimension_numbers = #tpu.dot_dimension_numbers<[1], [0], [0], [1], [0, 0, 1, 1], [], []>} : vector<8x40xf32>, vector<40x128xf32>, vector<8x128xf32> -> vector<8x128xf32>
    %c0_9 = arith.constant 0 : index
    %c0_10 = arith.constant 0 : index
    %10 = vector.load %arg5[%c0_9, %c0_10] : memref<8x1xf32, #tpu.memory_space<vmem>>, vector<8x1xf32>
    %11 = vector.broadcast %10 : vector<8x1xf32> to vector<8x128xf32>
    %12 = arith.addf %9, %11 : vector<8x128xf32>
    %c0_11 = arith.constant 0 : index
    %c0_12 = arith.constant 0 : index
    %13 = vector.load %arg6[%c0_11, %c0_12] : memref<8x128xf32, #tpu.memory_space<vmem>>, vector<8x128xf32>
    tpu.vector_store %arg6[%c0_11, %c0_12], %12 {strides = array<i32>} : memref<8x128xf32, #tpu.memory_space<vmem>>, vector<8x128xf32>,
    return
  }
  func.func @transform_0(%arg0: i32) -> (i32, i32) {
    %c0_i32 = arith.constant 0 : i32
    %c0_i32_0 = arith.constant 0 : i32
    return %c0_i32, %arg0 : i32, i32
  }
  func.func @transform_1(%arg0: i32) -> (i32, i32) {
    %c0_i32 = arith.constant 0 : i32
    %c0_i32_0 = arith.constant 0 : i32
    %c0_i32_1 = arith.constant 0 : i32
    return %c0_i32, %c0_i32_0 : i32, i32
  }
  func.func @transform_2(%arg0: i32) -> (i32, i32) {
    %c0_i32 = arith.constant 0 : i32
    %c0_i32_0 = arith.constant 0 : i32
    %c0_i32_1 = arith.constant 0 : i32
    return %c0_i32, %c0_i32_0 : i32, i32
  }
  func.func @transform_3(%arg0: i32) -> (i32, i32) {
    %c0_i32 = arith.constant 0 : i32
    %c0_i32_0 = arith.constant 0 : i32
    %c0_i32_1 = arith.constant 0 : i32
    return %c0_i32, %c0_i32_0 : i32, i32
  }
  func.func @transform_4(%arg0: i32) -> (i32, i32) {
    %c0_i32 = arith.constant 0 : i32
    %c0_i32_0 = arith.constant 0 : i32
    %c0_i32_1 = arith.constant 0 : i32
    return %c0_i32, %c0_i32_0 : i32, i32
  }
  func.func @transform_5(%arg0: i32) -> (i32, i32) {
    %c0_i32 = arith.constant 0 : i32
    %c0_i32_0 = arith.constant 0 : i32
    return %c0_i32, %arg0 : i32, i32
  }
}

</mosaic_0001>

<llo_original>
// kernel: slp_forward.1
$region0: #{slp_forward.1}
  #allocation0 [shape = 'u32[]', space=smem, size = 0x4, offset = 0x4, fixed_abs, tag = 'smem constant byte address 0x4 - core index']
  #allocation1 [shape = 'u32[144,128]{1,0:T(1,128)}', space=vmem, size = 0x12000, scoped, tag = 'internal scratch']
  %s0 = inlined_call_operand.vmem [shape: f32[8,128], index: 0, kind: input, shape index: {}]
  %s1 = inlined_call_operand.vmem [shape: f32[40,8], index: 1, kind: input, shape index: {}]
  %s2 = inlined_call_operand.vmem [shape: f32[40,1], index: 2, kind: input, shape index: {}]
  %s3 = inlined_call_operand.vmem [shape: f32[8,40], index: 3, kind: input, shape index: {}]
  %s4 = inlined_call_operand.vmem [shape: f32[8,1], index: 4, kind: input, shape index: {}]
  %s5 = inlined_call_operand.vmem [shape: f32[8,128], index: 5, kind: output, shape index: {}]
  %s6 = sld [smem:[#allocation0]]
  $region30: #{slp_forward.1} parent=0
    _
  %s8 = ssub.s32 1, %s6
  %s9 = scalar_select 0, %s8, %s6
  // Predicated region
  $region2: #{slp_forward.1} parent=0 // pred_check
    _
  $region3: #{slp_forward.1} parent=0 // pred_check_branch
    %11 = sbr.rel (0) target = $region5
  $region4: #{slp_forward.1} parent=0 // pred_region
    _
  $region5: #{slp_forward.1} parent=0 // pred_fallthru
    _
  // Predicated region
  $region6: #{slp_forward.1} parent=0 // pred_check
    _
  $region7: #{slp_forward.1} parent=0 // pred_check_branch
    %13 = sbr.rel (0) target = $region9
  $region8: #{slp_forward.1} parent=0 // pred_region
    _
  $region9: #{slp_forward.1} parent=0 // pred_fallthru
    _
  // Predicated region
  $region10: #{slp_forward.1} parent=0 // pred_check
    _
  $region11: #{slp_forward.1} parent=0 // pred_check_branch
    %15 = sbr.rel (0) target = $region13
  $region12: #{slp_forward.1} parent=0 // pred_region
    _
  $region13: #{slp_forward.1} parent=0 // pred_fallthru
    _
  // Predicated region
  $region14: #{slp_forward.1} parent=0 // pred_check
    _
  $region15: #{slp_forward.1} parent=0 // pred_check_branch
    %17 = sbr.rel (0) target = $region17
  $region16: #{slp_forward.1} parent=0 // pred_region
    _
  $region17: #{slp_forward.1} parent=0 // pred_fallthru
    _
  // Predicated region
  $region18: #{slp_forward.1} parent=0 // pred_check
    _
  $region19: #{slp_forward.1} parent=0 // pred_check_branch
    %19 = sbr.rel (0) target = $region21
  $region20: #{slp_forward.1} parent=0 // pred_region
    _
  $region21: #{slp_forward.1} parent=0 // pred_fallthru
    _
  %v20 = vld [vmem:[%s1] sm:$0xff]
  %v21 = vld [vmem:[%s1 + $0x8] sm:$0xff]
  %v22 = vld [vmem:[%s1 + $0x10] sm:$0xff]
  %v23 = vld [vmem:[%s1 + $0x18] sm:$0xff]
  %v24 = vld [vmem:[%s1 + $0x20] sm:$0xff]
  %v25 = vld [vmem:[%s0] sm:$0xff]
  %v26 = vld [vmem:[%s2] sm:$0xff]
  %v27 = vld [vmem:[%s2 + $0x8] sm:$0xff]
  %v28 = vld [vmem:[%s2 + $0x10] sm:$0xff]
  %v29 = vld [vmem:[%s2 + $0x18] sm:$0xff]
  %v30 = vld [vmem:[%s2 + $0x20] sm:$0xff]
  %32 = vset.pattern.permute.xlu0 0
  %33 = vperm.xlu0 %32, %v26
  %v34 = vpop.permute.xlu0 %33
  %37 = vset.pattern.permute.xlu0 0
  %38 = vperm.xlu0 %37, %v27
  %v39 = vpop.permute.xlu0 %38
  %42 = vset.pattern.permute.xlu0 0
  %43 = vperm.xlu0 %42, %v28
  %v44 = vpop.permute.xlu0 %43
  %47 = vset.pattern.permute.xlu0 0
  %48 = vperm.xlu0 %47, %v29
  %v49 = vpop.permute.xlu0 %48
  %52 = vset.pattern.permute.xlu0 0
  %53 = vperm.xlu0 %52, %v30
  %v54 = vpop.permute.xlu0 %53
  %vm56 = vcmask 64512
  %v58 = vsel %vm56, %v20, 0
  %v61 = vsel %vm56, %v21, 0
  %v64 = vsel %vm56, %v22, 0
  %v67 = vsel %vm56, %v23, 0
  %v70 = vsel %vm56, %v24, 0
  %72 = vmatprep.subr.mxu0 0.0
  %73 = vmatpush1.msra.mxu0 0.0
  %74 = vmatprep.subr.mxu0 0.0
  %75 = vmatpush1.msra.mxu0 0.0
  %76 = vmatprep.subr.mxu0 0.0
  %77 = vmatpush1.msra.mxu0 0.0
  %78 = vmatprep.subr.mxu0 0.0
  %79 = vmatpush1.msra.mxu0 0.0
  %80 = vmatprep.subr.mxu0 0.0
  %81 = vmatpush1.msra.mxu0 0.0
  %82 = vmatprep.subr.mxu0 0.0
  %83 = vmatpush1.msra.mxu0 0.0
  %84 = vmatprep.subr.mxu0 0.0
  %85 = vmatpush1.msra.mxu0 0.0
  %86 = vmatprep.subr.mxu0 0.0
  %87 = vmatpush1.msra.mxu0 0.0
  %88 = vmatprep.subr.mxu0 0.0
  %89 = vmatpush1.msra.mxu0 0.0
  %90 = vmatprep.subr.mxu0 0.0
  %91 = vmatpush1.msra.mxu0 0.0
  %92 = vmatprep.subr.mxu0 0.0
  %93 = vmatpush1.msra.mxu0 0.0
  %94 = vmatprep.subr.mxu0 0.0
  %95 = vmatpush1.msra.mxu0 0.0
  %96 = vmatprep.subr.mxu0 0.0
  %97 = vmatpush1.msra.mxu0 0.0
  %98 = vmatprep.subr.mxu0 0.0
  %99 = vmatpush1.msra.mxu0 0.0
  %100 = vmatprep.subr.mxu0 0.0
  %101 = vmatpush1.msra.mxu0 0.0
  %102 = vmatprep.subr.mxu0 0.0
  %103 = vmatpush1.msra.mxu0 %v25
  %104 = vmatprep.subr.mxu0 0.0
  %105 = vmatpush2.msra.mxu0 0.0
  %106 = vmatprep.subr.mxu0 0.0
  %107 = vmatpush2.msra.mxu0 0.0
  %108 = vmatprep.subr.mxu0 0.0
  %109 = vmatpush2.msra.mxu0 0.0
  %110 = vmatprep.subr.mxu0 0.0
  %111 = vmatpush2.msra.mxu0 0.0
  %112 = vmatprep.subr.mxu0 0.0
  %113 = vmatpush2.msra.mxu0 0.0
  %114 = vmatprep.subr.mxu0 0.0
  %115 = vmatpush2.msra.mxu0 0.0
  %116 = vmatprep.subr.mxu0 0.0
  %117 = vmatpush2.msra.mxu0 0.0
  %118 = vmatprep.subr.mxu0 0.0
  %119 = vmatpush2.msra.mxu0 0.0
  %120 = vmatprep.subr.mxu0 0.0
  %121 = vmatpush2.msra.mxu0 0.0
  %122 = vmatprep.subr.mxu0 0.0
  %123 = vmatpush2.msra.mxu0 0.0
  %124 = vmatprep.subr.mxu0 0.0
  %125 = vmatpush2.msra.mxu0 0.0
  %126 = vmatprep.subr.mxu0 0.0
  %127 = vmatpush2.msra.mxu0 0.0
  %128 = vmatprep.subr.mxu0 0.0
  %129 = vmatpush2.msra.mxu0 0.0
  %130 = vmatprep.subr.mxu0 0.0
  %131 = vmatpush2.msra.mxu0 0.0
  %132 = vmatprep.subr.mxu0 0.0
  %133 = vmatpush2.msra.mxu0 0.0
  %134 = vmatprep.subr.mxu0 0.0
  %135 = vmatpush2.msra.mxu0 0.0
  %136 = vmatprep.mubr.f32.mxu0 0.0
  %137 = vmatmul.mubr.f32.gmra.mxu0 %v58
  %v138 = vpop.f32.mrf.mxu0
  %v139 = vadd.f32 %v34, %v138
  %v140 = vpop.f32.mrf.mxu0
  %141 = vmatprep.mubr.f32.mxu0 0.0
  %142 = vmatmul.mubr.f32.gmra.mxu0 %v61
  %v143 = vpop.f32.mrf.mxu0
  %v144 = vadd.f32 %v39, %v143
  %v145 = vpop.f32.mrf.mxu0
  %146 = vmatprep.mubr.f32.mxu0 0.0
  %147 = vmatmul.mubr.f32.gmra.mxu0 %v64
  %v148 = vpop.f32.mrf.mxu0
  %v149 = vadd.f32 %v44, %v148
  %v150 = vpop.f32.mrf.mxu0
  %151 = vmatprep.mubr.f32.mxu0 0.0
  %152 = vmatmul.mubr.f32.gmra.mxu0 %v67
  %v153 = vpop.f32.mrf.mxu0
  %v154 = vadd.f32 %v49, %v153
  %v155 = vpop.f32.mrf.mxu0
  %156 = vmatprep.mubr.f32.mxu0 0.0
  %157 = vmatmul.mubr.f32.gmra.mxu0 %v70
  %v158 = vpop.f32.mrf.mxu0
  %v159 = vadd.f32 %v54, %v158
  %v160 = vpop.f32.mrf.mxu0
  %161 = vdwg.mxu0
  %v162 = vmax.f32 %v139, 0.0
  %v163 = vmax.f32 %v144, 0.0
  %v164 = vmax.f32 %v149, 0.0
  %v165 = vmax.f32 %v154, 0.0
  %v166 = vmax.f32 %v159, 0.0
  %v167 = vld [vmem:[%s3] sm:$0xff]
  %v168 = vld [vmem:[%s4] sm:$0xff]
  %170 = vset.pattern.permute.xlu0 0
  %171 = vperm.xlu0 %170, %v168
  %v172 = vpop.permute.xlu0 %171
  %vm174 = vcmask 326656
  %v176 = vsel %vm174, %v167, 0
  %178 = vmatprep.subr.mxu0 0.0
  %179 = vmatpush1.msra.mxu0 0.0
  %180 = vmatprep.subr.mxu0 0.0
  %181 = vmatpush1.msra.mxu0 0.0
  %182 = vmatprep.subr.mxu0 0.0
  %183 = vmatpush1.msra.mxu0 0.0
  %184 = vmatprep.subr.mxu0 0.0
  %185 = vmatpush1.msra.mxu0 0.0
  %186 = vmatprep.subr.mxu0 0.0
  %187 = vmatpush1.msra.mxu0 0.0
  %188 = vmatprep.subr.mxu0 0.0
  %189 = vmatpush1.msra.mxu0 0.0
  %190 = vmatprep.subr.mxu0 0.0
  %191 = vmatpush1.msra.mxu0 0.0
  %192 = vmatprep.subr.mxu0 0.0
  %193 = vmatpush1.msra.mxu0 0.0
  %194 = vmatprep.subr.mxu0 0.0
  %195 = vmatpush1.msra.mxu0 0.0
  %196 = vmatprep.subr.mxu0 0.0
  %197 = vmatpush1.msra.mxu0 0.0
  %198 = vmatprep.subr.mxu0 0.0
  %199 = vmatpush1.msra.mxu0 0.0
  %200 = vmatprep.subr.mxu0 0.0
  %201 = vmatpush1.msra.mxu0 %v166
  %202 = vmatprep.subr.mxu0 0.0
  %203 = vmatpush1.msra.mxu0 %v165
  %204 = vmatprep.subr.mxu0 0.0
  %205 = vmatpush1.msra.mxu0 %v164
  %206 = vmatprep.subr.mxu0 0.0
  %207 = vmatpush1.msra.mxu0 %v163
  %208 = vmatprep.subr.mxu0 0.0
  %209 = vmatpush1.msra.mxu0 %v162
  %210 = vmatprep.subr.mxu0 0.0
  %211 = vmatpush2.msra.mxu0 0.0
  %212 = vmatprep.subr.mxu0 0.0
  %213 = vmatpush2.msra.mxu0 0.0
  %214 = vmatprep.subr.mxu0 0.0
  %215 = vmatpush2.msra.mxu0 0.0
  %216 = vmatprep.subr.mxu0 0.0
  %217 = vmatpush2.msra.mxu0 0.0
  %218 = vmatprep.subr.mxu0 0.0
  %219 = vmatpush2.msra.mxu0 0.0
  %220 = vmatprep.subr.mxu0 0.0
  %221 = vmatpush2.msra.mxu0 0.0
  %222 = vmatprep.subr.mxu0 0.0
  %223 = vmatpush2.msra.mxu0 0.0
  %224 = vmatprep.subr.mxu0 0.0
  %225 = vmatpush2.msra.mxu0 0.0
  %226 = vmatprep.subr.mxu0 0.0
  %227 = vmatpush2.msra.mxu0 0.0
  %228 = vmatprep.subr.mxu0 0.0
  %229 = vmatpush2.msra.mxu0 0.0
  %230 = vmatprep.subr.mxu0 0.0
  %231 = vmatpush2.msra.mxu0 0.0
  %232 = vmatprep.subr.mxu0 0.0
  %233 = vmatpush2.msra.mxu0 0.0
  %234 = vmatprep.subr.mxu0 0.0
  %235 = vmatpush2.msra.mxu0 0.0
  %236 = vmatprep.subr.mxu0 0.0
  %237 = vmatpush2.msra.mxu0 0.0
  %238 = vmatprep.subr.mxu0 0.0
  %239 = vmatpush2.msra.mxu0 0.0
  %240 = vmatprep.subr.mxu0 0.0
  %241 = vmatpush2.msra.mxu0 0.0
  %242 = vmatprep.mubr.f32.mxu0 0.0
  %243 = vmatmul.mubr.f32.gmra.mxu0 %v176
  %v244 = vpop.f32.mrf.mxu0
  %v245 = vadd.f32 %v172, %v244
  %v246 = vpop.f32.mrf.mxu0
  %247 = vdwg.mxu0
  %248 = vst [vmem:[%s5] sm:$0xff] %v245
  // Predicated region
  $region22: #{slp_forward.1} parent=0 // pred_check
    _
  $region23: #{slp_forward.1} parent=0 // pred_check_branch
    %250 = sbr.rel (0) target = $region25
  $region24: #{slp_forward.1} parent=0 // pred_region
    _
  $region25: #{slp_forward.1} parent=0 // pred_fallthru
    _
  // Predicated region
  $region26: #{slp_forward.1} parent=0 // pred_check
    _
  $region27: #{slp_forward.1} parent=0 // pred_check_branch
    %252 = sbr.rel (0) target = $region29
  $region28: #{slp_forward.1} parent=0 // pred_region
    _
  $region29: #{slp_forward.1} parent=0 // pred_fallthru
    _

</llo_original>
